<compile_context>
chip_gen: v7x
topology: tpu7x:2x2x1
jax: 0.10.0
libtpu: 0.0.40
codegen_flags: <defaults>
</compile_context>

<pallas_src>
import jax
import jax.numpy as jnp
from jax.experimental import pallas as pl
from jax.experimental.pallas import tpu as pltpu


def _round_up(x: int, m: int) -> int:
    return (x + m - 1) // m * m


def fused_embed_mlp_kernel(idx_ref, m_ref, b1_ref, w2_ref, b2_ref, o_ref):
    """One batch tile: per-position one-hot gather of the pre-fused E@W1 table (f32 accum),
    then bias + ReLU + fc2.

    idx_ref: (TB, k)                  int32     token ids for this row tile
    m_ref:   (k, VOCAB_PAD, HID_PAD)  f32/bf16  M[j] = E @ W1[j*D:(j+1)*D], zero-padded
    b1_ref:  (1, HID_PAD)             f32
    w2_ref:  (HID_PAD, OUT_PAD)       f32/bf16  zero-col-padded fc2 weight
    b2_ref:  (1, OUT_PAD)             f32
    o_ref:   (TB, OUT_PAD)            f32
    """
    tb, k = idx_ref.shape
    _, vocab_pad, hid_pad = m_ref.shape
    mm_dtype = m_ref.dtype

    idx = idx_ref[...]                                               # (TB, k) int32
    col = jax.lax.broadcasted_iota(jnp.int32, (tb, vocab_pad), 1)    # block-local iota

    # fc1 output accumulated directly: h = sum_j one_hot(idx[:, j]) @ M[j].
    # The one-hot is built per position against a VOCAB_PAD-wide block only (~1 full
    # compare pass total instead of k), emitted straight in the matmul dtype (0/1 is exact
    # in bf16), and each (TB, VOCAB_PAD) @ (VOCAB_PAD, HID_PAD) matmul accumulates into f32.
    h = jnp.zeros((tb, hid_pad), jnp.float32)
    for j in range(k):  # k is a small static constant -> unrolled at trace time
        oh_j = (idx[:, j:j + 1] == col).astype(mm_dtype)             # (TB, VOCAB_PAD)
        h = h + jnp.dot(oh_j, m_ref[j], preferred_element_type=jnp.float32)

    # bias + ReLU epilogue stays on the f32 accumulator (VPU).
    h = jnp.maximum(h + b1_ref[...], 0.0)

    # fc2 + bias; lane-dense (TB, OUT_PAD) store.
    y = jnp.dot(h.astype(w2_ref.dtype), w2_ref[...], preferred_element_type=jnp.float32)
    o_ref[...] = (y + b2_ref[...]).astype(o_ref.dtype)


def prepare_params(E_table, W1, b1, W2, b2, k, *, param_dtype=jnp.bfloat16):
    """One-time parameter prep (hoisted out of the forward): pre-fuse E@W1, pad, cast."""
    vocab, D = E_table.shape
    kD, hidden = W1.shape
    assert kD == k * D, (kD, k, D)
    out_size = W2.shape[1]

    VOCAB_PAD = _round_up(vocab, 64)
    HID_PAD = _round_up(hidden, 128)
    OUT_PAD = _round_up(out_size, 128)

    # Pre-fused gather table: M[j, v, :] = E[v] @ W1[j*D:(j+1)*D].  The kernel's one-hot
    # gather + sum over j reproduces fc1(E[idx].flatten()) (same per-row dot products).
    M = jnp.einsum('vd,jdh->jvh', E_table, W1.reshape(k, D, hidden),
                   precision=jax.lax.Precision.HIGHEST)              # (k, vocab, hidden) f32
    M_pad = (jnp.zeros((k, VOCAB_PAD, HID_PAD), jnp.float32)
             .at[:, :vocab, :hidden].set(M).astype(param_dtype))

    W2_p = (jnp.zeros((HID_PAD, OUT_PAD), jnp.float32)
            .at[:hidden, :out_size].set(W2).astype(param_dtype))
    b1_p = jnp.zeros((1, HID_PAD), jnp.float32).at[0, :hidden].set(b1)
    b2_p = jnp.zeros((1, OUT_PAD), jnp.float32).at[0, :out_size].set(b2)

    return dict(M=M_pad, b1=b1_p, W2=W2_p, b2=b2_p,
                k=k, out_size=out_size,
                vocab_pad=VOCAB_PAD, hid_pad=HID_PAD, out_pad=OUT_PAD)


def model_e_forward(x_idx, params, *, slice_output=True):
    """x_idx: (B, k) int token ids.  Returns (B, out_size) f32 logits
    (or the padded (B_pad, OUT_PAD) block when slice_output=False)."""
    M, b1_p, W2_p, b2_p = params['M'], params['b1'], params['W2'], params['b2']
    k = params['k']
    out_size = params['out_size']
    VOCAB_PAD, HID_PAD, OUT_PAD = params['vocab_pad'], params['hid_pad'], params['out_pad']
    B = x_idx.shape[0]
    assert x_idx.shape[1] == k

    # Batch tiling: large tiles amortize the ~0.35us/step grid overhead (all buffers are
    # well under the scoped-VMEM limit even on v7x); once the batch exceeds 256 rows, keep
    # >= 2 tiles so v7x's two TensorCores both get work via the "parallel" axis.
    rows = _round_up(max(B, 8), 8)
    if rows <= 256:
        TB = rows
    else:
        TB = min(512, _round_up((rows + 1) // 2, 8))
    B_pad = _round_up(rows, TB)

    idx_p = jnp.zeros((B_pad, k), jnp.int32).at[:B, :].set(x_idx.astype(jnp.int32))

    grid = (B_pad // TB,)

    nbytes = lambda a: a.size * a.dtype.itemsize
    flops = 2 * B_pad * (k * VOCAB_PAD * HID_PAD + HID_PAD * OUT_PAD)
    bytes_accessed = int(sum(nbytes(a) for a in (idx_p, M, b1_p, W2_p, b2_p))
                         + B_pad * OUT_PAD * 4)

    out = pl.pallas_call(
        fused_embed_mlp_kernel,
        out_shape=jax.ShapeDtypeStruct((B_pad, OUT_PAD), jnp.float32),
        grid=grid,
        in_specs=[
            pl.BlockSpec((TB, k), lambda i: (i, 0)),                     # token ids (per tile)
            pl.BlockSpec((k, VOCAB_PAD, HID_PAD), lambda i: (0, 0, 0)),  # M = E@W1  (resident)
            pl.BlockSpec((1, HID_PAD), lambda i: (0, 0)),                # b1        (resident)
            pl.BlockSpec((HID_PAD, OUT_PAD), lambda i: (0, 0)),          # W2        (resident)
            pl.BlockSpec((1, OUT_PAD), lambda i: (0, 0)),                # b2        (resident)
        ],
        out_specs=pl.BlockSpec((TB, OUT_PAD), lambda i: (i, 0)),
        compiler_params=pltpu.CompilerParams(dimension_semantics=("parallel",)),
        cost_estimate=pl.CostEstimate(flops=flops, bytes_accessed=bytes_accessed,
                                      transcendentals=0),
    )(idx_p, M, b1_p, W2_p, b2_p)

    if slice_output:
        return out[:B, :out_size]
    return out


def init_params(key, vocab_size, embedding_dim, output_size, k):
    """Deterministic parameter init mirroring the PyTorch module's shapes."""
    k1, k2, k3, k4, k5 = jax.random.split(key, 5)
    in_dim = k * embedding_dim
    hidden = 128
    E = jax.random.normal(k1, (vocab_size, embedding_dim), jnp.float32)
    lim1 = 1.0 / jnp.sqrt(in_dim)
    W1 = jax.random.uniform(k2, (in_dim, hidden), jnp.float32, -lim1, lim1)
    b1 = jax.random.uniform(k3, (hidden,), jnp.float32, -lim1, lim1)
    lim2 = 1.0 / jnp.sqrt(hidden)
    W2 = jax.random.uniform(k4, (hidden, output_size), jnp.float32, -lim2, lim2)
    b2 = jax.random.uniform(k5, (output_size,), jnp.float32, -lim2, lim2)
    return E, W1, b1, W2, b2


def ref_forward(x_idx, E, W1, b1, W2, b2):
    """Plain f32 reference mirroring the PyTorch forward (gather -> fc1 -> ReLU -> fc2)."""
    B, k = x_idx.shape
    D = E.shape[1]
    hdot = lambda a, b: jnp.dot(a, b, precision=jax.lax.Precision.HIGHEST)
    xe = E[x_idx.reshape(-1)].reshape(B, k * D)
    h = jnp.maximum(hdot(xe, W1) + b1, 0.0)
    return hdot(h, W2) + b2


def ref_forward_prepped(x_idx, params):
    """Reference consuming the SAME prepped params as the kernel (mirrors its dtype
    rounding), used for tight tolerance checks on the bf16 path."""
    M = params['M'].astype(jnp.float32)
    W2 = params['W2'].astype(jnp.float32)
    B, k = x_idx.shape
    h = jnp.zeros((B, M.shape[2]), jnp.float32)
    for j in range(k):
        h = h + M[j][x_idx[:, j]]
    h = jnp.maximum(h + params['b1'], 0.0)
    h = h.astype(params['W2'].dtype).astype(jnp.float32)
    y = jnp.dot(h, W2, precision=jax.lax.Precision.HIGHEST) + params['b2']
    return y[:, :params['out_size']]


if __name__ == "__main__":
    vocab_size, embedding_dim, output_size, k = 50, 8, 10, 4
    batch = 8

    key = jax.random.PRNGKey(0)
    pkey, xkey = jax.random.split(key)
    E, W1, b1, W2, b2 = init_params(pkey, vocab_size, embedding_dim, output_size, k)
    x_idx = jax.random.randint(xkey, (batch, k), 0, vocab_size, dtype=jnp.int32)

    ref = ref_forward(x_idx, E, W1, b1, W2, b2)

    # f32 path (faithful to the PyTorch module's f32 numerics).
    params_f32 = prepare_params(E, W1, b1, W2, b2, k, param_dtype=jnp.float32)
    out_f32 = model_e_forward(x_idx, params_f32)
    jax.block_until_ready(out_f32)
    assert out_f32.shape == (batch, output_size)
    assert jnp.allclose(out_f32, ref, atol=1e-4, rtol=1e-4), \
        float(jnp.max(jnp.abs(out_f32 - ref)))

    # bf16-weight path (default): MXU-native matmul inputs, f32 accumulation + f32 epilogue.
    params_bf16 = prepare_params(E, W1, b1, W2, b2, k)   # param_dtype=jnp.bfloat16
    out_bf16 = model_e_forward(x_idx, params_bf16)
    jax.block_until_ready(out_bf16)
    ref_bf16 = ref_forward_prepped(x_idx, params_bf16)
    assert jnp.allclose(out_bf16, ref_bf16, atol=2e-3, rtol=2e-3), \
        float(jnp.max(jnp.abs(out_bf16 - ref_bf16)))
    assert jnp.allclose(out_bf16, ref, atol=1e-1, rtol=1e-1)   # sanity vs exact f32

    print("KERNEL_OK")
</pallas_src>

<mosaic_0001>
module attributes {stable_mosaic.version = 11 : i64} {
  func.func @fused_embed_mlp_kernel(%arg0: i32, %arg1: memref<8x4xi32, #tpu.memory_space<vmem>>, %arg2: memref<4x64x128xf32, #tpu.memory_space<vmem>>, %arg3: memref<1x128xf32, #tpu.memory_space<vmem>>, %arg4: memref<128x128xf32, #tpu.memory_space<vmem>>, %arg5: memref<1x128xf32, #tpu.memory_space<vmem>>, %arg6: memref<8x128xf32, #tpu.memory_space<vmem>>) attributes {dimension_semantics = [#tpu.dimension_semantics<parallel>], iteration_bounds = array<i64: 1>, scalar_prefetch = 0 : i64, scratch_operands = 0 : i64, tpu.core_type = #tpu.core_type<tc>, window_params = [{transform_indices = @transform_0, window_bounds = array<i64: 8, 4>}, {pipeline_mode = #tpu.pipeline_mode<synchronous>, transform_indices = @transform_1, window_bounds = array<i64: 4, 64, 128>}, {pipeline_mode = #tpu.pipeline_mode<synchronous>, transform_indices = @transform_2, window_bounds = array<i64: 1, 128>}, {pipeline_mode = #tpu.pipeline_mode<synchronous>, transform_indices = @transform_3, window_bounds = array<i64: 128, 128>}, {pipeline_mode = #tpu.pipeline_mode<synchronous>, transform_indices = @transform_4, window_bounds = array<i64: 1, 128>}, {transform_indices = @transform_5, window_bounds = array<i64: 8, 128>}]} {
    %c0 = arith.constant 0 : index
    %c0_0 = arith.constant 0 : index
    %0 = vector.load %arg1[%c0, %c0_0] : memref<8x4xi32, #tpu.memory_space<vmem>>, vector<8x4xi32>
    %1 = tpu.iota {dimensions = array<i32: 1>} : vector<8x64xi32>
    %cst = arith.constant 0.000000e+00 : f32
    %2 = vector.broadcast %cst : f32 to vector<8x128xf32>
    %3 = vector.extract_strided_slice %0 {offsets = [0, 0], sizes = [8, 1], strides = [1, 1]} : vector<8x4xi32> to vector<8x1xi32>
    %4 = vector.broadcast %3 : vector<8x1xi32> to vector<8x64xi32>
    %5 = arith.cmpi eq, %4, %1 : vector<8x64xi32>
    %6 = arith.extui %5 : vector<8x64xi1> to vector<8x64xi32>
    %7 = arith.sitofp %6 : vector<8x64xi32> to vector<8x64xf32>
    %c0_1 = arith.constant 0 : index
    %c0_2 = arith.constant 0 : index
    %c0_3 = arith.constant 0 : index
    %8 = vector.load %arg2[%c0_1, %c0_2, %c0_3] : memref<4x64x128xf32, #tpu.memory_space<vmem>>, vector<1x64x128xf32>
    %9 = vector.shape_cast %8 : vector<1x64x128xf32> to vector<64x128xf32>
    %cst_4 = arith.constant dense<0.000000e+00> : vector<8x128xf32>
    %10 = tpu.matmul %7, %9, %cst_4 {dimension_numbers = #tpu.dot_dimension_numbers<[1], [0], [0], [1], [0, 0, 1, 1], [], []>} : vector<8x64xf32>, vector<64x128xf32>, vector<8x128xf32> -> vector<8x128xf32>
    %11 = arith.addf %2, %10 : vector<8x128xf32>
    %12 = vector.extract_strided_slice %0 {offsets = [0, 1], sizes = [8, 1], strides = [1, 1]} : vector<8x4xi32> to vector<8x1xi32>
    %13 = vector.broadcast %12 : vector<8x1xi32> to vector<8x64xi32>
    %14 = arith.cmpi eq, %13, %1 : vector<8x64xi32>
    %15 = arith.extui %14 : vector<8x64xi1> to vector<8x64xi32>
    %16 = arith.sitofp %15 : vector<8x64xi32> to vector<8x64xf32>
    %c1 = arith.constant 1 : index
    %c0_5 = arith.constant 0 : index
    %c0_6 = arith.constant 0 : index
    %17 = vector.load %arg2[%c1, %c0_5, %c0_6] : memref<4x64x128xf32, #tpu.memory_space<vmem>>, vector<1x64x128xf32>
    %18 = vector.shape_cast %17 : vector<1x64x128xf32> to vector<64x128xf32>
    %cst_7 = arith.constant dense<0.000000e+00> : vector<8x128xf32>
    %19 = tpu.matmul %16, %18, %cst_7 {dimension_numbers = #tpu.dot_dimension_numbers<[1], [0], [0], [1], [0, 0, 1, 1], [], []>} : vector<8x64xf32>, vector<64x128xf32>, vector<8x128xf32> -> vector<8x128xf32>
    %20 = arith.addf %11, %19 : vector<8x128xf32>
    %21 = vector.extract_strided_slice %0 {offsets = [0, 2], sizes = [8, 1], strides = [1, 1]} : vector<8x4xi32> to vector<8x1xi32>
    %22 = vector.broadcast %21 : vector<8x1xi32> to vector<8x64xi32>
    %23 = arith.cmpi eq, %22, %1 : vector<8x64xi32>
    %24 = arith.extui %23 : vector<8x64xi1> to vector<8x64xi32>
    %25 = arith.sitofp %24 : vector<8x64xi32> to vector<8x64xf32>
    %c2 = arith.constant 2 : index
    %c0_8 = arith.constant 0 : index
    %c0_9 = arith.constant 0 : index
    %26 = vector.load %arg2[%c2, %c0_8, %c0_9] : memref<4x64x128xf32, #tpu.memory_space<vmem>>, vector<1x64x128xf32>
    %27 = vector.shape_cast %26 : vector<1x64x128xf32> to vector<64x128xf32>
    %cst_10 = arith.constant dense<0.000000e+00> : vector<8x128xf32>
    %28 = tpu.matmul %25, %27, %cst_10 {dimension_numbers = #tpu.dot_dimension_numbers<[1], [0], [0], [1], [0, 0, 1, 1], [], []>} : vector<8x64xf32>, vector<64x128xf32>, vector<8x128xf32> -> vector<8x128xf32>
    %29 = arith.addf %20, %28 : vector<8x128xf32>
    %30 = vector.extract_strided_slice %0 {offsets = [0, 3], sizes = [8, 1], strides = [1, 1]} : vector<8x4xi32> to vector<8x1xi32>
    %31 = vector.broadcast %30 : vector<8x1xi32> to vector<8x64xi32>
    %32 = arith.cmpi eq, %31, %1 : vector<8x64xi32>
    %33 = arith.extui %32 : vector<8x64xi1> to vector<8x64xi32>
    %34 = arith.sitofp %33 : vector<8x64xi32> to vector<8x64xf32>
    %c3 = arith.constant 3 : index
    %c0_11 = arith.constant 0 : index
    %c0_12 = arith.constant 0 : index
    %35 = vector.load %arg2[%c3, %c0_11, %c0_12] : memref<4x64x128xf32, #tpu.memory_space<vmem>>, vector<1x64x128xf32>
    %36 = vector.shape_cast %35 : vector<1x64x128xf32> to vector<64x128xf32>
    %cst_13 = arith.constant dense<0.000000e+00> : vector<8x128xf32>
    %37 = tpu.matmul %34, %36, %cst_13 {dimension_numbers = #tpu.dot_dimension_numbers<[1], [0], [0], [1], [0, 0, 1, 1], [], []>} : vector<8x64xf32>, vector<64x128xf32>, vector<8x128xf32> -> vector<8x128xf32>
    %38 = arith.addf %29, %37 : vector<8x128xf32>
    %c0_14 = arith.constant 0 : index
    %c0_15 = arith.constant 0 : index
    %39 = vector.load %arg3[%c0_14, %c0_15] : memref<1x128xf32, #tpu.memory_space<vmem>>, vector<1x128xf32>
    %40 = vector.broadcast %39 : vector<1x128xf32> to vector<8x128xf32>
    %41 = arith.addf %38, %40 : vector<8x128xf32>
    %cst_16 = arith.constant 0.000000e+00 : f32
    %42 = vector.broadcast %cst_16 : f32 to vector<8x128xf32>
    %43 = arith.maximumf %41, %42 : vector<8x128xf32>
    %c0_17 = arith.constant 0 : index
    %c0_18 = arith.constant 0 : index
    %44 = vector.load %arg4[%c0_17, %c0_18] : memref<128x128xf32, #tpu.memory_space<vmem>>, vector<128x128xf32>
    %cst_19 = arith.constant dense<0.000000e+00> : vector<8x128xf32>
    %45 = tpu.matmul %43, %44, %cst_19 {dimension_numbers = #tpu.dot_dimension_numbers<[1], [0], [0], [1], [0, 0, 1, 1], [], []>} : vector<8x128xf32>, vector<128x128xf32>, vector<8x128xf32> -> vector<8x128xf32>
    %c0_20 = arith.constant 0 : index
    %c0_21 = arith.constant 0 : index
    %46 = vector.load %arg5[%c0_20, %c0_21] : memref<1x128xf32, #tpu.memory_space<vmem>>, vector<1x128xf32>
    %47 = vector.broadcast %46 : vector<1x128xf32> to vector<8x128xf32>
    %48 = arith.addf %45, %47 : vector<8x128xf32>
    %c0_22 = arith.constant 0 : index
    %c0_23 = arith.constant 0 : index
    %49 = vector.load %arg6[%c0_22, %c0_23] : memref<8x128xf32, #tpu.memory_space<vmem>>, vector<8x128xf32>
    tpu.vector_store %arg6[%c0_22, %c0_23], %48 {strides = array<i32>} : memref<8x128xf32, #tpu.memory_space<vmem>>, vector<8x128xf32>,
    return
  }
  func.func @transform_0(%arg0: i32) -> (i32, i32) {
    %c0_i32 = arith.constant 0 : i32
    %c0_i32_0 = arith.constant 0 : i32
    return %arg0, %c0_i32 : i32, i32
  }
  func.func @transform_1(%arg0: i32) -> (i32, i32, i32) {
    %c0_i32 = arith.constant 0 : i32
    %c0_i32_0 = arith.constant 0 : i32
    %c0_i32_1 = arith.constant 0 : i32
    %c0_i32_2 = arith.constant 0 : i32
    return %c0_i32, %c0_i32_0, %c0_i32_1 : i32, i32, i32
  }
  func.func @transform_2(%arg0: i32) -> (i32, i32) {
    %c0_i32 = arith.constant 0 : i32
    %c0_i32_0 = arith.constant 0 : i32
    %c0_i32_1 = arith.constant 0 : i32
    return %c0_i32, %c0_i32_0 : i32, i32
  }
  func.func @transform_3(%arg0: i32) -> (i32, i32) {
    %c0_i32 = arith.constant 0 : i32
    %c0_i32_0 = arith.constant 0 : i32
    %c0_i32_1 = arith.constant 0 : i32
    return %c0_i32, %c0_i32_0 : i32, i32
  }
  func.func @transform_4(%arg0: i32) -> (i32, i32) {
    %c0_i32 = arith.constant 0 : i32
    %c0_i32_0 = arith.constant 0 : i32
    %c0_i32_1 = arith.constant 0 : i32
    return %c0_i32, %c0_i32_0 : i32, i32
  }
  func.func @transform_5(%arg0: i32) -> (i32, i32) {
    %c0_i32 = arith.constant 0 : i32
    %c0_i32_0 = arith.constant 0 : i32
    return %arg0, %c0_i32 : i32, i32
  }
}

</mosaic_0001>

<llo_original>
// kernel: tpu_custom_call.1
$region0: #{tpu_custom_call.1}
  #allocation0 [shape = 'u32[]', space=smem, size = 0x4, offset = 0x4, fixed_abs, tag = 'smem constant byte address 0x4 - core index']
  #allocation1 [shape = 'u32[144,128]{1,0:T(1,128)}', space=vmem, size = 0x12000, scoped, tag = 'internal scratch']
  %s0 = inlined_call_operand.vmem [shape: s32[8,4], index: 0, kind: input, shape index: {}]
  %s1 = inlined_call_operand.hbm [shape: f32[4,64,128], index: 1, kind: input, shape index: {}]
  %s2 = inlined_call_operand.vmem [shape: f32[1,128], index: 2, kind: input, shape index: {}]
  %s3 = inlined_call_operand.hbm [shape: f32[128,128], index: 3, kind: input, shape index: {}]
  %s4 = inlined_call_operand.vmem [shape: f32[1,128], index: 4, kind: input, shape index: {}]
  %s5 = inlined_call_operand.hbm [shape: f32[8,128], index: 5, kind: output, shape index: {}]
  %s6 = sld [smem:[#allocation0]]
  $region38: #{tpu_custom_call.1} parent=0
    _
  %s8 = ssub.s32 1, %s6
  %s9 = scalar_select 0, %s8, %s6
  $region1: #{tpu_custom_call.1} parent=0
    #allocation2 [shape = 'u8[131072]{0}', space=vmem, size = 0x20000, scoped, tag = 'input window, operand 1, single buffered']
    #allocation3 [shape = 's32[1]{0}', space=sflag, size = 0x4, scoped, tag = 'scoped memory for tpu_custom_call.1']
    #allocation4 [shape = 's32[1]{0}', space=sflag, size = 0x4, scoped, tag = 'scoped memory for tpu_custom_call.1']
    #allocation5 [shape = 'u8[65536]{0}', space=vmem, size = 0x10000, scoped, tag = 'input window, operand 3, single buffered']
    #allocation6 [shape = 's32[1]{0}', space=sflag, size = 0x4, scoped, tag = 'scoped memory for tpu_custom_call.1']
    #allocation7 [shape = 'u8[4096]{0}', space=vmem, size = 0x1000, scoped, tag = 'output window, operand 0, single buffered']
    %10 = vsyncpa [#allocation3], 0
    %11 = vsyncpa [#allocation6], 0
    %12 = vsyncpa [#allocation4], 0
    // Predicated region
    $region2: #{tpu_custom_call.1} parent=1 // pred_check
      _
    $region3: #{tpu_custom_call.1} parent=1 // pred_check_branch
      %14 = sbr.rel (0) target = $region5
    $region4: #{tpu_custom_call.1} parent=1 // pred_region
      _
    $region5: #{tpu_custom_call.1} parent=1 // pred_fallthru
      _
    // Predicated region
    $region6: #{tpu_custom_call.1} parent=1 // pred_check
      _
    $region7: #{tpu_custom_call.1} parent=1 // pred_check_branch
      %16 = sbr.rel (0) target = $region9
    $region8: #{tpu_custom_call.1} parent=1 // pred_region
      %s18 = ssub.s32 4096, 4096
      %19 = vsyncadd [#allocation3], %s18
      %s20 = sshll.u32 [#allocation2], 4
      %s21 = int_to_ptr.vmem [resolvable:$true] %s20
      %26 = dma.hbm_to_vmem [thread:$0]  %s1, 4096, %s21, [#allocation3], 128, 128, 8
    $region9: #{tpu_custom_call.1} parent=1 // pred_fallthru
      _
    // Predicated region
    $region10: #{tpu_custom_call.1} parent=1 // pred_check
      _
    $region11: #{tpu_custom_call.1} parent=1 // pred_check_branch
      %28 = sbr.rel (0) target = $region13
    $region12: #{tpu_custom_call.1} parent=1 // pred_region
      _
    $region13: #{tpu_custom_call.1} parent=1 // pred_fallthru
      _
    // Predicated region
    $region14: #{tpu_custom_call.1} parent=1 // pred_check
      _
    $region15: #{tpu_custom_call.1} parent=1 // pred_check_branch
      %30 = sbr.rel (0) target = $region17
    $region16: #{tpu_custom_call.1} parent=1 // pred_region
      %s32 = ssub.s32 2048, 2048
      %33 = vsyncadd [#allocation6], %s32
      %s34 = sshll.u32 [#allocation5], 4
      %s35 = int_to_ptr.vmem [resolvable:$true] %s34
      %40 = dma.hbm_to_vmem [thread:$0]  %s3, 2048, %s35, [#allocation6], 128, 128, 8
    $region17: #{tpu_custom_call.1} parent=1 // pred_fallthru
      _
    // Predicated region
    $region18: #{tpu_custom_call.1} parent=1 // pred_check
      _
    $region19: #{tpu_custom_call.1} parent=1 // pred_check_branch
      %42 = sbr.rel (0) target = $region21
    $region20: #{tpu_custom_call.1} parent=1 // pred_region
      _
    $region21: #{tpu_custom_call.1} parent=1 // pred_fallthru
      _
    // Predicated region
    $region22: #{tpu_custom_call.1} parent=1 // pred_check
      _
    $region23: #{tpu_custom_call.1} parent=1 // pred_check_branch
      %44 = sbr.rel (0) target = $region25
    $region24: #{tpu_custom_call.1} parent=1 // pred_region
      %45 = dma.done [#allocation3], 4096
    $region25: #{tpu_custom_call.1} parent=1 // pred_fallthru
      _
    // Predicated region
    $region26: #{tpu_custom_call.1} parent=1 // pred_check
      _
    $region27: #{tpu_custom_call.1} parent=1 // pred_check_branch
      %47 = sbr.rel (0) target = $region29
    $region28: #{tpu_custom_call.1} parent=1 // pred_region
      %48 = dma.done [#allocation6], 2048
    $region29: #{tpu_custom_call.1} parent=1 // pred_fallthru
      _
    %v49 = vld [vmem:[%s0] sm:$0xff]
    %v50 = vlaneseq
    %v51 = vand.u32 %v50, 127
    %52 = vset.pattern.permute.xlu0 0
    %53 = vperm.xlu0 %52, %v49
    %v54 = vpop.permute.xlu0 %53
    %vm55 = vcmp.eq.s32.totalorder %v54, %v51
    %v56 = vsel %vm55, 1, 0
    %v57 = vcvt.s32.f32 %v56
    %v58 = vld [vmem:[#allocation2] sm:$0xff]
    %v59 = vld [vmem:[#allocation2 + $0x8] sm:$0xff]
    %v60 = vld [vmem:[#allocation2 + $0x10] sm:$0xff]
    %v61 = vld [vmem:[#allocation2 + $0x18] sm:$0xff]
    %v62 = vld [vmem:[#allocation2 + $0x20] sm:$0xff]
    %v63 = vld [vmem:[#allocation2 + $0x28] sm:$0xff]
    %v64 = vld [vmem:[#allocation2 + $0x30] sm:$0xff]
    %v65 = vld [vmem:[#allocation2 + $0x38] sm:$0xff]
    %66 = vset.pattern.permute.xlu0 1
    %67 = vperm.xlu0 %66, %v49
    %v68 = vpop.permute.xlu0 %67
    %vm69 = vcmp.eq.s32.totalorder %v68, %v51
    %v70 = vsel %vm69, 1, 0
    %v71 = vcvt.s32.f32 %v70
    %s72 = scalar_lea.vmem [#allocation2], 64
    %v73 = vld [vmem:[%s72] sm:$0xff]
    %v74 = vld [vmem:[%s72 + $0x8] sm:$0xff]
    %v75 = vld [vmem:[%s72 + $0x10] sm:$0xff]
    %v76 = vld [vmem:[%s72 + $0x18] sm:$0xff]
    %v77 = vld [vmem:[%s72 + $0x20] sm:$0xff]
    %v78 = vld [vmem:[%s72 + $0x28] sm:$0xff]
    %v79 = vld [vmem:[%s72 + $0x30] sm:$0xff]
    %v80 = vld [vmem:[%s72 + $0x38] sm:$0xff]
    %vm81 = vcmask 523264
    %v83 = vsel %vm81, %v71, 0
    %85 = vmatprep.subr.mxu0 0.0
    %86 = vmatpush1.msra.mxu0 %v73
    %87 = vmatprep.subr.mxu0 0.0
    %88 = vmatpush1.msra.mxu0 %v74
    %89 = vmatprep.subr.mxu0 0.0
    %90 = vmatpush1.msra.mxu0 %v75
    %91 = vmatprep.subr.mxu0 0.0
    %92 = vmatpush1.msra.mxu0 %v76
    %93 = vmatprep.subr.mxu0 0.0
    %94 = vmatpush1.msra.mxu0 %v77
    %95 = vmatprep.subr.mxu0 0.0
    %96 = vmatpush1.msra.mxu0 %v78
    %97 = vmatprep.subr.mxu0 0.0
    %98 = vmatpush1.msra.mxu0 %v79
    %99 = vmatprep.subr.mxu0 0.0
    %100 = vmatpush1.msra.mxu0 %v80
    %101 = vmatprep.subr.mxu0 0.0
    %102 = vmatpush1.msra.mxu0 0.0
    %103 = vmatprep.subr.mxu0 0.0
    %104 = vmatpush1.msra.mxu0 0.0
    %105 = vmatprep.subr.mxu0 0.0
    %106 = vmatpush1.msra.mxu0 0.0
    %107 = vmatprep.subr.mxu0 0.0
    %108 = vmatpush1.msra.mxu0 0.0
    %109 = vmatprep.subr.mxu0 0.0
    %110 = vmatpush1.msra.mxu0 0.0
    %111 = vmatprep.subr.mxu0 0.0
    %112 = vmatpush1.msra.mxu0 0.0
    %113 = vmatprep.subr.mxu0 0.0
    %114 = vmatpush1.msra.mxu0 0.0
    %115 = vmatprep.subr.mxu0 0.0
    %116 = vmatpush1.msra.mxu0 0.0
    %117 = vmatprep.subr.mxu0 0.0
    %118 = vmatpush1.msra.mxu0 0.0
    %119 = vmatprep.subr.mxu0 0.0
    %120 = vmatpush1.msra.mxu0 0.0
    %121 = vmatprep.subr.mxu0 0.0
    %122 = vmatpush1.msra.mxu0 0.0
    %123 = vmatprep.subr.mxu0 0.0
    %124 = vmatpush1.msra.mxu0 0.0
    %125 = vmatprep.subr.mxu0 0.0
    %126 = vmatpush1.msra.mxu0 0.0
    %127 = vmatprep.subr.mxu0 0.0
    %128 = vmatpush1.msra.mxu0 0.0
    %129 = vmatprep.subr.mxu0 0.0
    %130 = vmatpush1.msra.mxu0 0.0
    %131 = vmatprep.subr.mxu0 0.0
    %132 = vmatpush1.msra.mxu0 0.0
    %133 = vmatprep.subr.mxu0 0.0
    %134 = vmatpush1.msra.mxu0 0.0
    %135 = vmatprep.subr.mxu0 0.0
    %136 = vmatpush1.msra.mxu0 0.0
    %137 = vmatprep.subr.mxu0 0.0
    %138 = vmatpush1.msra.mxu0 0.0
    %139 = vmatprep.subr.mxu0 0.0
    %140 = vmatpush1.msra.mxu0 0.0
    %141 = vmatprep.subr.mxu0 0.0
    %142 = vmatpush1.msra.mxu0 0.0
    %143 = vmatprep.subr.mxu0 0.0
    %144 = vmatpush1.msra.mxu0 0.0
    %145 = vmatprep.subr.mxu0 0.0
    %146 = vmatpush1.msra.mxu0 0.0
    %147 = vmatprep.subr.mxu0 0.0
    %148 = vmatpush1.msra.mxu0 0.0
    %149 = vmatprep.mubr.f32.mxu0 0.0
    %150 = vmatmul.mubr.f32.gmra.mrb[0].mxu0 %v83
    %v151 = vpop.f32.mrb[0].mxu0
    %v152 = vadd.f32 0.0, %v151
    %v153 = vpop.f32.mrb[0].mxu0
    %154 = vdwg.mxu0
    %v156 = vsel %vm81, %v57, 0
    %158 = vmatprep.subr.mxu0 0.0
    %159 = vmatpush1.msra.mxu0 %v58
    %160 = vmatprep.subr.mxu0 0.0
    %161 = vmatpush1.msra.mxu0 %v59
    %162 = vmatprep.subr.mxu0 0.0
    %163 = vmatpush1.msra.mxu0 %v60
    %164 = vmatprep.subr.mxu0 0.0
    %165 = vmatpush1.msra.mxu0 %v61
    %166 = vmatprep.subr.mxu0 0.0
    %167 = vmatpush1.msra.mxu0 %v62
    %168 = vmatprep.subr.mxu0 0.0
    %169 = vmatpush1.msra.mxu0 %v63
    %170 = vmatprep.subr.mxu0 0.0
    %171 = vmatpush1.msra.mxu0 %v64
    %172 = vmatprep.subr.mxu0 0.0
    %173 = vmatpush1.msra.mxu0 %v65
    %174 = vmatprep.subr.mxu0 0.0
    %175 = vmatpush1.msra.mxu0 0.0
    %176 = vmatprep.subr.mxu0 0.0
    %177 = vmatpush1.msra.mxu0 0.0
    %178 = vmatprep.subr.mxu0 0.0
    %179 = vmatpush1.msra.mxu0 0.0
    %180 = vmatprep.subr.mxu0 0.0
    %181 = vmatpush1.msra.mxu0 0.0
    %182 = vmatprep.subr.mxu0 0.0
    %183 = vmatpush1.msra.mxu0 0.0
    %184 = vmatprep.subr.mxu0 0.0
    %185 = vmatpush1.msra.mxu0 0.0
    %186 = vmatprep.subr.mxu0 0.0
    %187 = vmatpush1.msra.mxu0 0.0
    %188 = vmatprep.subr.mxu0 0.0
    %189 = vmatpush1.msra.mxu0 0.0
    %190 = vmatprep.subr.mxu0 0.0
    %191 = vmatpush1.msra.mxu0 0.0
    %192 = vmatprep.subr.mxu0 0.0
    %193 = vmatpush1.msra.mxu0 0.0
    %194 = vmatprep.subr.mxu0 0.0
    %195 = vmatpush1.msra.mxu0 0.0
    %196 = vmatprep.subr.mxu0 0.0
    %197 = vmatpush1.msra.mxu0 0.0
    %198 = vmatprep.subr.mxu0 0.0
    %199 = vmatpush1.msra.mxu0 0.0
    %200 = vmatprep.subr.mxu0 0.0
    %201 = vmatpush1.msra.mxu0 0.0
    %202 = vmatprep.subr.mxu0 0.0
    %203 = vmatpush1.msra.mxu0 0.0
    %204 = vmatprep.subr.mxu0 0.0
    %205 = vmatpush1.msra.mxu0 0.0
    %206 = vmatprep.subr.mxu0 0.0
    %207 = vmatpush1.msra.mxu0 0.0
    %208 = vmatprep.subr.mxu0 0.0
    %209 = vmatpush1.msra.mxu0 0.0
    %210 = vmatprep.subr.mxu0 0.0
    %211 = vmatpush1.msra.mxu0 0.0
    %212 = vmatprep.subr.mxu0 0.0
    %213 = vmatpush1.msra.mxu0 0.0
    %214 = vmatprep.subr.mxu0 0.0
    %215 = vmatpush1.msra.mxu0 0.0
    %216 = vmatprep.subr.mxu0 0.0
    %217 = vmatpush1.msra.mxu0 0.0
    %218 = vmatprep.subr.mxu0 0.0
    %219 = vmatpush1.msra.mxu0 0.0
    %220 = vmatprep.subr.mxu0 0.0
    %221 = vmatpush1.msra.mxu0 0.0
    %222 = vmatprep.mubr.f32.mxu0 0.0
    %223 = vmatmul.mubr.f32.gmra.mrb[0].mxu0 %v156
    %v224 = vpop.f32.mrb[0].mxu0
    %v225 = vadd.f32 %v152, %v224
    %v226 = vpop.f32.mrb[0].mxu0
    %227 = vdwg.mxu0
    %228 = vset.pattern.permute.xlu0 2
    %229 = vperm.xlu0 %228, %v49
    %v230 = vpop.permute.xlu0 %229
    %vm231 = vcmp.eq.s32.totalorder %v230, %v51
    %v232 = vsel %vm231, 1, 0
    %v233 = vcvt.s32.f32 %v232
    %s234 = scalar_lea.vmem [#allocation2], 128
    %v235 = vld [vmem:[%s234] sm:$0xff]
    %v236 = vld [vmem:[%s234 + $0x8] sm:$0xff]
    %v237 = vld [vmem:[%s234 + $0x10] sm:$0xff]
    %v238 = vld [vmem:[%s234 + $0x18] sm:$0xff]
    %v239 = vld [vmem:[%s234 + $0x20] sm:$0xff]
    %v240 = vld [vmem:[%s234 + $0x28] sm:$0xff]
    %v241 = vld [vmem:[%s234 + $0x30] sm:$0xff]
    %v242 = vld [vmem:[%s234 + $0x38] sm:$0xff]
    %v244 = vsel %vm81, %v233, 0
    %246 = vmatprep.subr.mxu0 0.0
    %247 = vmatpush1.msra.mxu0 %v235
    %248 = vmatprep.subr.mxu0 0.0
    %249 = vmatpush1.msra.mxu0 %v236
    %250 = vmatprep.subr.mxu0 0.0
    %251 = vmatpush1.msra.mxu0 %v237
    %252 = vmatprep.subr.mxu0 0.0
    %253 = vmatpush1.msra.mxu0 %v238
    %254 = vmatprep.subr.mxu0 0.0
    %255 = vmatpush1.msra.mxu0 %v239
    %256 = vmatprep.subr.mxu0 0.0
    %257 = vmatpush1.msra.mxu0 %v240
    %258 = vmatprep.subr.mxu0 0.0
    %259 = vmatpush1.msra.mxu0 %v241
    %260 = vmatprep.subr.mxu0 0.0
    %261 = vmatpush1.msra.mxu0 %v242
    %262 = vmatprep.subr.mxu0 0.0
    %263 = vmatpush1.msra.mxu0 0.0
    %264 = vmatprep.subr.mxu0 0.0
    %265 = vmatpush1.msra.mxu0 0.0
    %266 = vmatprep.subr.mxu0 0.0
    %267 = vmatpush1.msra.mxu0 0.0
    %268 = vmatprep.subr.mxu0 0.0
    %269 = vmatpush1.msra.mxu0 0.0
    %270 = vmatprep.subr.mxu0 0.0
    %271 = vmatpush1.msra.mxu0 0.0
    %272 = vmatprep.subr.mxu0 0.0
    %273 = vmatpush1.msra.mxu0 0.0
    %274 = vmatprep.subr.mxu0 0.0
    %275 = vmatpush1.msra.mxu0 0.0
    %276 = vmatprep.subr.mxu0 0.0
    %277 = vmatpush1.msra.mxu0 0.0
    %278 = vmatprep.subr.mxu0 0.0
    %279 = vmatpush1.msra.mxu0 0.0
    %280 = vmatprep.subr.mxu0 0.0
    %281 = vmatpush1.msra.mxu0 0.0
    %282 = vmatprep.subr.mxu0 0.0
    %283 = vmatpush1.msra.mxu0 0.0
    %284 = vmatprep.subr.mxu0 0.0
    %285 = vmatpush1.msra.mxu0 0.0
    %286 = vmatprep.subr.mxu0 0.0
    %287 = vmatpush1.msra.mxu0 0.0
    %288 = vmatprep.subr.mxu0 0.0
    %289 = vmatpush1.msra.mxu0 0.0
    %290 = vmatprep.subr.mxu0 0.0
    %291 = vmatpush1.msra.mxu0 0.0
    %292 = vmatprep.subr.mxu0 0.0
    %293 = vmatpush1.msra.mxu0 0.0
    %294 = vmatprep.subr.mxu0 0.0
    %295 = vmatpush1.msra.mxu0 0.0
    %296 = vmatprep.subr.mxu0 0.0
    %297 = vmatpush1.msra.mxu0 0.0
    %298 = vmatprep.subr.mxu0 0.0
    %299 = vmatpush1.msra.mxu0 0.0
    %300 = vmatprep.subr.mxu0 0.0
    %301 = vmatpush1.msra.mxu0 0.0
    %302 = vmatprep.subr.mxu0 0.0
    %303 = vmatpush1.msra.mxu0 0.0
    %304 = vmatprep.subr.mxu0 0.0
    %305 = vmatpush1.msra.mxu0 0.0
    %306 = vmatprep.subr.mxu0 0.0
    %307 = vmatpush1.msra.mxu0 0.0
    %308 = vmatprep.subr.mxu0 0.0
    %309 = vmatpush1.msra.mxu0 0.0
    %310 = vmatprep.mubr.f32.mxu0 0.0
    %311 = vmatmul.mubr.f32.gmra.mrb[0].mxu0 %v244
    %v312 = vpop.f32.mrb[0].mxu0
    %v313 = vadd.f32 0.0, %v312
    %v314 = vpop.f32.mrb[0].mxu0
    %315 = vdwg.mxu0
    %v316 = vadd.f32 %v225, %v313
    %317 = vset.pattern.permute.xlu0 3
    %318 = vperm.xlu0 %317, %v49
    %v319 = vpop.permute.xlu0 %318
    %vm320 = vcmp.eq.s32.totalorder %v319, %v51
    %v321 = vsel %vm320, 1, 0
    %v322 = vcvt.s32.f32 %v321
    %s323 = scalar_lea.vmem [#allocation2], 192
    %v324 = vld [vmem:[%s323] sm:$0xff]
    %v325 = vld [vmem:[%s323 + $0x8] sm:$0xff]
    %v326 = vld [vmem:[%s323 + $0x10] sm:$0xff]
    %v327 = vld [vmem:[%s323 + $0x18] sm:$0xff]
    %v328 = vld [vmem:[%s323 + $0x20] sm:$0xff]
    %v329 = vld [vmem:[%s323 + $0x28] sm:$0xff]
    %v330 = vld [vmem:[%s323 + $0x30] sm:$0xff]
    %v331 = vld [vmem:[%s323 + $0x38] sm:$0xff]
    %v333 = vsel %vm81, %v322, 0
    %335 = vmatprep.subr.mxu0 0.0
    %336 = vmatpush1.msra.mxu0 %v324
    %337 = vmatprep.subr.mxu0 0.0
    %338 = vmatpush1.msra.mxu0 %v325
    %339 = vmatprep.subr.mxu0 0.0
    %340 = vmatpush1.msra.mxu0 %v326
    %341 = vmatprep.subr.mxu0 0.0
    %342 = vmatpush1.msra.mxu0 %v327
    %343 = vmatprep.subr.mxu0 0.0
    %344 = vmatpush1.msra.mxu0 %v328
    %345 = vmatprep.subr.mxu0 0.0
    %346 = vmatpush1.msra.mxu0 %v329
    %347 = vmatprep.subr.mxu0 0.0
    %348 = vmatpush1.msra.mxu0 %v330
    %349 = vmatprep.subr.mxu0 0.0
    %350 = vmatpush1.msra.mxu0 %v331
    %351 = vmatprep.subr.mxu0 0.0
    %352 = vmatpush1.msra.mxu0 0.0
    %353 = vmatprep.subr.mxu0 0.0
    %354 = vmatpush1.msra.mxu0 0.0
    %355 = vmatprep.subr.mxu0 0.0
    %356 = vmatpush1.msra.mxu0 0.0
    %357 = vmatprep.subr.mxu0 0.0
    %358 = vmatpush1.msra.mxu0 0.0
    %359 = vmatprep.subr.mxu0 0.0
    %360 = vmatpush1.msra.mxu0 0.0
    %361 = vmatprep.subr.mxu0 0.0
    %362 = vmatpush1.msra.mxu0 0.0
    %363 = vmatprep.subr.mxu0 0.0
    %364 = vmatpush1.msra.mxu0 0.0
    %365 = vmatprep.subr.mxu0 0.0
    %366 = vmatpush1.msra.mxu0 0.0
    %367 = vmatprep.subr.mxu0 0.0
    %368 = vmatpush1.msra.mxu0 0.0
    %369 = vmatprep.subr.mxu0 0.0
    %370 = vmatpush1.msra.mxu0 0.0
    %371 = vmatprep.subr.mxu0 0.0
    %372 = vmatpush1.msra.mxu0 0.0
    %373 = vmatprep.subr.mxu0 0.0
    %374 = vmatpush1.msra.mxu0 0.0
    %375 = vmatprep.subr.mxu0 0.0
    %376 = vmatpush1.msra.mxu0 0.0
    %377 = vmatprep.subr.mxu0 0.0
    %378 = vmatpush1.msra.mxu0 0.0
    %379 = vmatprep.subr.mxu0 0.0
    %380 = vmatpush1.msra.mxu0 0.0
    %381 = vmatprep.subr.mxu0 0.0
    %382 = vmatpush1.msra.mxu0 0.0
    %383 = vmatprep.subr.mxu0 0.0
    %384 = vmatpush1.msra.mxu0 0.0
    %385 = vmatprep.subr.mxu0 0.0
    %386 = vmatpush1.msra.mxu0 0.0
    %387 = vmatprep.subr.mxu0 0.0
    %388 = vmatpush1.msra.mxu0 0.0
    %389 = vmatprep.subr.mxu0 0.0
    %390 = vmatpush1.msra.mxu0 0.0
    %391 = vmatprep.subr.mxu0 0.0
    %392 = vmatpush1.msra.mxu0 0.0
    %393 = vmatprep.subr.mxu0 0.0
    %394 = vmatpush1.msra.mxu0 0.0
    %395 = vmatprep.subr.mxu0 0.0
    %396 = vmatpush1.msra.mxu0 0.0
    %397 = vmatprep.subr.mxu0 0.0
    %398 = vmatpush1.msra.mxu0 0.0
    %399 = vmatprep.mubr.f32.mxu0 0.0
    %400 = vmatmul.mubr.f32.gmra.mrb[0].mxu0 %v333
    %v401 = vpop.f32.mrb[0].mxu0
    %v402 = vadd.f32 0.0, %v401
    %v403 = vpop.f32.mrb[0].mxu0
    %404 = vdwg.mxu0
    %v405 = vadd.f32 %v316, %v402
    %v406 = vld [vmem:[%s2] sm:$0x1]
    %v408 = vlaneseq
    %v409 = vshrl.u32 %v408, 7
    %v410 = vsub.s32 0, %v409
    %v411 = vrot.slane %v406, %v410
    %v413 = vadd.f32 %v405, %v411
    %v414 = vmax.f32 %v413, 0.0
    %v415 = vld [vmem:[#allocation5] sm:$0xff]
    %v416 = vld [vmem:[#allocation5 + $0x8] sm:$0xff]
    %v417 = vld [vmem:[#allocation5 + $0x10] sm:$0xff]
    %v418 = vld [vmem:[#allocation5 + $0x18] sm:$0xff]
    %v419 = vld [vmem:[#allocation5 + $0x20] sm:$0xff]
    %v420 = vld [vmem:[#allocation5 + $0x28] sm:$0xff]
    %v421 = vld [vmem:[#allocation5 + $0x30] sm:$0xff]
    %v422 = vld [vmem:[#allocation5 + $0x38] sm:$0xff]
    %v423 = vld [vmem:[#allocation5 + $0x40] sm:$0xff]
    %v424 = vld [vmem:[#allocation5 + $0x48] sm:$0xff]
    %v425 = vld [vmem:[#allocation5 + $0x50] sm:$0xff]
    %v426 = vld [vmem:[#allocation5 + $0x58] sm:$0xff]
    %v427 = vld [vmem:[#allocation5 + $0x60] sm:$0xff]
    %v428 = vld [vmem:[#allocation5 + $0x68] sm:$0xff]
    %v429 = vld [vmem:[#allocation5 + $0x70] sm:$0xff]
    %v430 = vld [vmem:[#allocation5 + $0x78] sm:$0xff]
    %v431 = vld [vmem:[%s4] sm:$0x1]
    %v433 = vlaneseq
    %v434 = vshrl.u32 %v433, 7
    %v435 = vsub.s32 0, %v434
    %v436 = vrot.slane %v431, %v435
    %438 = vmatprep.subr.mxu0 0.0
    %439 = vmatpush1.msra.mxu0 %v415
    %440 = vmatprep.subr.mxu0 0.0
    %441 = vmatpush1.msra.mxu0 %v416
    %442 = vmatprep.subr.mxu0 0.0
    %443 = vmatpush1.msra.mxu0 %v417
    %444 = vmatprep.subr.mxu0 0.0
    %445 = vmatpush1.msra.mxu0 %v418
    %446 = vmatprep.subr.mxu0 0.0
    %447 = vmatpush1.msra.mxu0 %v419
    %448 = vmatprep.subr.mxu0 0.0
    %449 = vmatpush1.msra.mxu0 %v420
    %450 = vmatprep.subr.mxu0 0.0
    %451 = vmatpush1.msra.mxu0 %v421
    %452 = vmatprep.subr.mxu0 0.0
    %453 = vmatpush1.msra.mxu0 %v422
    %454 = vmatprep.subr.mxu0 0.0
    %455 = vmatpush1.msra.mxu0 %v423
    %456 = vmatprep.subr.mxu0 0.0
    %457 = vmatpush1.msra.mxu0 %v424
    %458 = vmatprep.subr.mxu0 0.0
    %459 = vmatpush1.msra.mxu0 %v425
    %460 = vmatprep.subr.mxu0 0.0
    %461 = vmatpush1.msra.mxu0 %v426
    %462 = vmatprep.subr.mxu0 0.0
    %463 = vmatpush1.msra.mxu0 %v427
    %464 = vmatprep.subr.mxu0 0.0
    %465 = vmatpush1.msra.mxu0 %v428
    %466 = vmatprep.subr.mxu0 0.0
    %467 = vmatpush1.msra.mxu0 %v429
    %468 = vmatprep.subr.mxu0 0.0
    %469 = vmatpush1.msra.mxu0 %v430
    %470 = vmatprep.subr.mxu0 0.0
    %471 = vmatpush1.msra.mxu0 0.0
    %472 = vmatprep.subr.mxu0 0.0
    %473 = vmatpush1.msra.mxu0 0.0
    %474 = vmatprep.subr.mxu0 0.0
    %475 = vmatpush1.msra.mxu0 0.0
    %476 = vmatprep.subr.mxu0 0.0
    %477 = vmatpush1.msra.mxu0 0.0
    %478 = vmatprep.subr.mxu0 0.0
    %479 = vmatpush1.msra.mxu0 0.0
    %480 = vmatprep.subr.mxu0 0.0
    %481 = vmatpush1.msra.mxu0 0.0
    %482 = vmatprep.subr.mxu0 0.0
    %483 = vmatpush1.msra.mxu0 0.0
    %484 = vmatprep.subr.mxu0 0.0
    %485 = vmatpush1.msra.mxu0 0.0
    %486 = vmatprep.subr.mxu0 0.0
    %487 = vmatpush1.msra.mxu0 0.0
    %488 = vmatprep.subr.mxu0 0.0
    %489 = vmatpush1.msra.mxu0 0.0
    %490 = vmatprep.subr.mxu0 0.0
    %491 = vmatpush1.msra.mxu0 0.0
    %492 = vmatprep.subr.mxu0 0.0
    %493 = vmatpush1.msra.mxu0 0.0
    %494 = vmatprep.subr.mxu0 0.0
    %495 = vmatpush1.msra.mxu0 0.0
    %496 = vmatprep.subr.mxu0 0.0
    %497 = vmatpush1.msra.mxu0 0.0
    %498 = vmatprep.subr.mxu0 0.0
    %499 = vmatpush1.msra.mxu0 0.0
    %500 = vmatprep.subr.mxu0 0.0
    %501 = vmatpush1.msra.mxu0 0.0
    %502 = vmatprep.mubr.f32.mxu0 0.0
    %503 = vmatmul.mubr.f32.gmra.mrb[0].mxu0 %v414
    %v504 = vpop.f32.mrb[0].mxu0
    %v505 = vadd.f32 %v436, %v504
    %v506 = vpop.f32.mrb[0].mxu0
    %507 = vdwg.mxu0
    %508 = vst [vmem:[#allocation7] sm:$0xff] %v505
    // Predicated region
    $region30: #{tpu_custom_call.1} parent=1 // pred_check
      _
    $region31: #{tpu_custom_call.1} parent=1 // pred_check_branch
      %510 = sbr.rel (0) target = $region33
    $region32: #{tpu_custom_call.1} parent=1 // pred_region
      %s512 = ssub.s32 128, 128
      %513 = vsyncadd [#allocation4], %s512
      %s515 = sshll.u32 [#allocation7], 4
      %s516 = int_to_ptr.vmem [resolvable:$true] %s515
      %518 = dma.vmem_to_hbm [thread:$0]  %s516, 128, %s5, [#allocation4]
    $region33: #{tpu_custom_call.1} parent=1 // pred_fallthru
      _
    // Predicated region
    $region34: #{tpu_custom_call.1} parent=1 // pred_check
      _
    $region35: #{tpu_custom_call.1} parent=1 // pred_check_branch
      %520 = sbr.rel (0) target = $region37
    $region36: #{tpu_custom_call.1} parent=1 // pred_region
      %521 = dma.done [#allocation4], 128
    $region37: #{tpu_custom_call.1} parent=1 // pred_fallthru
      _
    %522 = vsyncpa [#allocation3], 1
    %523 = vsyncpa [#allocation6], 1
    %524 = vsyncpa [#allocation4], 1

</llo_original>
